<compile_context>
chip_gen: v5e
topology: v5e:2x2
jax: 0.10.0
libtpu: 0.0.40
codegen_flags: <defaults>
</compile_context>

<pallas_src>
import functools

import jax
import jax.numpy as jnp
import numpy as np
from jax.experimental import pallas as pl
from jax.experimental.pallas import tpu as pltpu

_EPS = 1e-5                    # nn.BatchNorm2d default eps
MXU_DTYPE = jnp.bfloat16       # MXU operand dtype (accumulation is always f32)
# bf16 MXU operands => compare against the exact-f32 reference at
# mixed-precision tolerance.
_TOL = 3e-2


# ------------------------------ Pallas kernel ------------------------------ #

def _make_residual_kernel(n, ho, stride):
    """Fused residual block on lane-folded activations [rows, W*C]."""

    def kernel(xpf_ref, w1_ref, w2_ref, w3_ref, g1_ref, bt1_ref,
               g2_ref, bt2_ref, b3_ref, cavg_ref, out_ref, y1p_ref):
        m = n * ho
        fold = out_ref.shape[1]            # Wo * Cout
        mxu = w1_ref.dtype
        cavg = cavg_ref[...]               # [fold, fold] channel-average matrix

        def rows(src_ref, dy, s):
            # Rows dy, dy+s, ... of every image, folded to an [m, K] MXU operand.
            if s == 1:
                blk = src_ref[:, dy:dy + ho, :]
            else:  # stride > 1 path (not exercised by the demo below)
                blk = src_ref[:, pl.ds(dy, ho, stride=s), :]
            return blk.reshape(m, src_ref.shape[2]).astype(mxu)

        def conv3x3(src_ref, band_ref, s):
            # 3 banded MXU matmuls (K = full folded row width) replace the 9
            # tiny K=Cin matmuls of a naive im2col formulation.
            return sum(jnp.dot(rows(src_ref, dy, s), band_ref[dy],
                               preferred_element_type=jnp.float32)
                       for dy in range(3))

        def bn_relu(acc, g_row, bt_row, relu):
            # BatchNorm2d training-mode stats (per channel, over all n*ho*wo
            # samples), computed entirely in the folded layout: the `cavg`
            # matmul both averages over the wo lane-groups and broadcasts the
            # per-channel stat back onto every lane.
            mu = jnp.mean(jnp.dot(acc, cavg, preferred_element_type=jnp.float32),
                          axis=0, keepdims=True)
            d = acc - mu
            var = jnp.mean(jnp.dot(d * d, cavg, preferred_element_type=jnp.float32),
                           axis=0, keepdims=True)
            y = d * jax.lax.rsqrt(var + _EPS) * g_row + bt_row
            return jnp.maximum(y, 0.0) if relu else y

        # conv1 -> bn1 -> relu  (conv bias omitted: cancelled by BN mean subtraction)
        y1 = bn_relu(conv3x3(xpf_ref, w1_ref, stride),
                     g1_ref[...], bt1_ref[...], relu=True)

        # Stage y1 in a zero-padded VMEM scratch -- no HBM round trip and no
        # second im2col expansion between the two convolutions.
        y1p_ref[...] = jnp.zeros(y1p_ref.shape, y1p_ref.dtype)
        y1p_ref[:, 1:ho + 1, :] = y1.reshape(n, ho, fold)

        # conv2 -> bn2, fused shortcut (1x1-conv band or identity band), add, relu.
        y2 = bn_relu(conv3x3(y1p_ref, w2_ref, 1),
                     g2_ref[...], bt2_ref[...], relu=False)
        sc = jnp.dot(rows(xpf_ref, 1, stride), w3_ref[...],
                     preferred_element_type=jnp.float32) + b3_ref[...]
        out_ref[...] = jnp.maximum(y2 + sc, 0.0)   # lane-dense [n*ho, wo*cout] store

    return kernel


# --------------------------- banded-weight helpers -------------------------- #

def _conv3x3_band_weights(w_oihw, w_in, w_out, stride, dtype):
    """Fold a 3x3 conv weight (OIHW, padding=1) into 3 banded matmul weights,
    one per kernel row dy, acting on lane-folded rows [.., W_in*Cin]:
        band[dy][(w*stride + dx - 1)*Cin + c, w*Cout + o] = w[o, c, dy, dx]
    (taps that fall into the W zero-padding are simply dropped)."""
    cout, cin, _, _ = w_oihw.shape
    kin, fold = w_in * cin, w_out * cout
    sel = np.zeros((3, cin, kin, w_out), np.float32)        # [dx, c, k, w]
    for dx in range(3):
        for w in range(w_out):
            src = w * stride + dx - 1
            if 0 <= src < w_in:
                for c in range(cin):
                    sel[dx, c, src * cin + c, w] = 1.0
    bands = jnp.einsum("xckw,ocyx->ykwo", jnp.asarray(sel),
                       w_oihw.astype(jnp.float32))
    return bands.reshape(3, kin, fold).astype(dtype)


def _shortcut_band_weights(m_cin_cout, w_in, w_out, stride, dtype):
    """1x1 shortcut conv (or identity) as a banded matmul on the same folded rows:
        band[(w*stride)*Cin + c, w*Cout + o] = m[c, o]."""
    cin, cout = m_cin_cout.shape
    kin, fold = w_in * cin, w_out * cout
    sel = np.zeros((cin, kin, w_out), np.float32)
    for w in range(w_out):
        for c in range(cin):
            sel[c, (w * stride) * cin + c, w] = 1.0
    band = jnp.einsum("ckw,co->kwo", jnp.asarray(sel),
                      m_cin_cout.astype(jnp.float32))
    return band.reshape(kin, fold).astype(dtype)


def _fold_channel_vec(v, wo):
    """Per-channel [C] vector -> [1, wo*C] row in the folded (w*C + c) layout."""
    return jnp.tile(v.astype(jnp.float32), wo).reshape(1, -1)


def _channel_average_matrix(wo, c):
    """S[j, k] = 1/wo if j%c == k%c else 0  (average over w AND re-broadcast)."""
    lane = np.arange(wo * c)
    return jnp.asarray(
        (lane[:, None] % c == lane[None, :] % c).astype(np.float32) / wo)


# --------------------------- parameters & wrapper --------------------------- #

def init_residual_params(key, in_channels, out_channels, use_1x1_conv):
    """Deterministic synthetic init; conv weights kept in PyTorch OIHW layout."""
    ks = jax.random.split(key, 12)

    def u(k, shape, fan_in):
        bound = 1.0 / np.sqrt(fan_in)
        return jax.random.uniform(k, shape, jnp.float32, -bound, bound)

    p = {
        "w1": u(ks[0], (out_channels, in_channels, 3, 3), in_channels * 9),
        "b1": u(ks[1], (out_channels,), in_channels * 9),
        "w2": u(ks[2], (out_channels, out_channels, 3, 3), out_channels * 9),
        "b2": u(ks[3], (out_channels,), out_channels * 9),
        "g1": 1.0 + 0.1 * jax.random.normal(ks[4], (out_channels,), jnp.float32),
        "bt1": 0.1 * jax.random.normal(ks[5], (out_channels,), jnp.float32),
        "g2": 1.0 + 0.1 * jax.random.normal(ks[6], (out_channels,), jnp.float32),
        "bt2": 0.1 * jax.random.normal(ks[7], (out_channels,), jnp.float32),
    }
    if use_1x1_conv:
        p["w3"] = u(ks[8], (out_channels, in_channels, 1, 1), in_channels)
        p["b3"] = u(ks[9], (out_channels,), in_channels)
    return p


@functools.partial(jax.jit, static_argnames=("stride", "use_1x1_conv"))
def residual_forward(x_nchw, p, *, stride=1, use_1x1_conv=False):
    """Pallas implementation of Residual.forward. Input/output are NCHW."""
    x = jnp.transpose(x_nchw, (0, 2, 3, 1)).astype(jnp.float32)     # NCHW -> NHWC
    n, h, w, cin = x.shape
    cout = p["w1"].shape[0]
    ho = (h - 1) // stride + 1
    wo = (w - 1) // stride + 1
    fold = wo * cout
    m = n * ho
    kin = w * cin

    # Activations in a lane-folded [rows, W*Cin] layout; only H is physically
    # zero-padded (W padding is folded into the banded weights) -> no 9x
    # im2col slab in HBM.  Activations stay f32 in HBM at these toy sizes and
    # are cast to bf16 in-register right at the MXU operand.
    xpf = jnp.pad(x, ((0, 0), (1, 1), (0, 0), (0, 0))).reshape(n, h + 2, kin)

    w1b = _conv3x3_band_weights(p["w1"], w, wo, stride, MXU_DTYPE)   # [3, kin, fold]
    w2b = _conv3x3_band_weights(p["w2"], wo, wo, 1, MXU_DTYPE)       # [3, fold, fold]
    if use_1x1_conv:
        w3b = _shortcut_band_weights(p["w3"][:, :, 0, 0].T, w, wo, stride, MXU_DTYPE)
        b3f = _fold_channel_vec(p["b3"], wo)
    else:
        assert stride == 1 and cin == cout, "identity shortcut needs matching shapes"
        w3b = _shortcut_band_weights(jnp.eye(cout, dtype=jnp.float32), w, wo, 1,
                                     MXU_DTYPE)
        b3f = jnp.zeros((1, fold), jnp.float32)
    g1f, bt1f = _fold_channel_vec(p["g1"], wo), _fold_channel_vec(p["bt1"], wo)
    g2f, bt2f = _fold_channel_vec(p["g2"], wo), _fold_channel_vec(p["bt2"], wo)
    cavg = _channel_average_matrix(wo, cout)
    # NOTE: conv biases b1/b2 are intentionally NOT passed: a per-channel
    # constant added before BatchNorm is exactly cancelled by the mean subtract.

    args = (xpf, w1b, w2b, w3b, g1f, bt1f, g2f, bt2f, b3f, cavg)
    in_bytes = sum(int(np.prod(a.shape)) * np.dtype(a.dtype).itemsize for a in args)
    out_bytes = m * fold * 4
    scratch_bytes = n * (ho + 2) * fold * 4
    flops = (2 * m * fold * 3 * kin          # conv1: 3 banded matmuls
             + 2 * m * fold * 3 * fold       # conv2: 3 banded matmuls
             + 2 * m * fold * kin            # shortcut matmul
             + 4 * 2 * m * fold * fold)      # BN stat matmuls

    out_folded = pl.pallas_call(
        _make_residual_kernel(n, ho, stride),
        out_shape=jax.ShapeDtypeStruct((m, fold), jnp.float32),
        in_specs=[pl.BlockSpec(memory_space=pltpu.MemorySpace.VMEM)] * len(args),
        out_specs=pl.BlockSpec(memory_space=pltpu.MemorySpace.VMEM),
        scratch_shapes=[pltpu.VMEM((n, ho + 2, fold), jnp.float32)],
        compiler_params=pltpu.CompilerParams(
            vmem_limit_bytes=int(min(
                96 * 1024 * 1024,
                8 * (in_bytes + out_bytes + scratch_bytes) + (4 << 20)))),
        cost_estimate=pl.CostEstimate(flops=int(flops),
                                      transcendentals=2 * fold,
                                      bytes_accessed=int(in_bytes + out_bytes)),
    )(*args)

    out = out_folded.reshape(n, ho, wo, cout)
    return jnp.transpose(out, (0, 3, 1, 2))                          # -> NCHW


# ------------------------------ JAX reference ------------------------------- #

def residual_reference(x, p, *, stride=1, use_1x1_conv=False):
    """Exact f32 reference matching the PyTorch module (training-mode BN)."""
    def conv(v, wgt, b, s, pad):
        y = jax.lax.conv_general_dilated(
            v, wgt, (s, s), ((pad, pad), (pad, pad)),
            dimension_numbers=("NCHW", "OIHW", "NCHW"),
            precision=jax.lax.Precision.HIGHEST)
        return y + b[None, :, None, None]

    def bn(v, g, bt):
        mean = jnp.mean(v, axis=(0, 2, 3), keepdims=True)
        var = jnp.mean(jnp.square(v - mean), axis=(0, 2, 3), keepdims=True)
        return ((v - mean) * jax.lax.rsqrt(var + _EPS)
                * g[None, :, None, None] + bt[None, :, None, None])

    y = jax.nn.relu(bn(conv(x, p["w1"], p["b1"], stride, 1), p["g1"], p["bt1"]))
    y = bn(conv(y, p["w2"], p["b2"], 1, 1), p["g2"], p["bt2"])
    sc = conv(x, p["w3"], p["b3"], stride, 0) if use_1x1_conv else x
    return jax.nn.relu(y + sc)


# ----------------------------------- main ----------------------------------- #

if __name__ == "__main__":
    key = jax.random.PRNGKey(0)
    kx, kp1, kp2 = jax.random.split(key, 3)
    x = jax.random.normal(kx, (2, 4, 16, 16), jnp.float32)  # NCHW, like PyTorch

    # Config 1: Residual(4, 8, use_1x1_conv=True, stride=1)
    p1 = init_residual_params(kp1, 4, 8, use_1x1_conv=True)
    out1 = jax.block_until_ready(
        residual_forward(x, p1, stride=1, use_1x1_conv=True))
    ref1 = residual_reference(x, p1, stride=1, use_1x1_conv=True)
    assert out1.shape == (2, 8, 16, 16)
    np.testing.assert_allclose(np.asarray(out1), np.asarray(ref1),
                               rtol=_TOL, atol=_TOL)

    # Config 2: Residual(4, 4) with identity shortcut
    p2 = init_residual_params(kp2, 4, 4, use_1x1_conv=False)
    out2 = jax.block_until_ready(
        residual_forward(x, p2, stride=1, use_1x1_conv=False))
    ref2 = residual_reference(x, p2, stride=1, use_1x1_conv=False)
    assert out2.shape == (2, 4, 16, 16)
    np.testing.assert_allclose(np.asarray(out2), np.asarray(ref2),
                               rtol=_TOL, atol=_TOL)

    print("KERNEL_OK")
</pallas_src>

<mosaic_0001>
module attributes {stable_mosaic.version = 11 : i64} {
  func.func @kernel(%arg0: memref<2x18x64xf32, #tpu.memory_space<vmem>>, %arg1: memref<3x64x128xbf16, #tpu.memory_space<vmem>>, %arg2: memref<3x128x128xbf16, #tpu.memory_space<vmem>>, %arg3: memref<64x128xbf16, #tpu.memory_space<vmem>>, %arg4: memref<1x128xf32, #tpu.memory_space<vmem>>, %arg5: memref<1x128xf32, #tpu.memory_space<vmem>>, %arg6: memref<1x128xf32, #tpu.memory_space<vmem>>, %arg7: memref<1x128xf32, #tpu.memory_space<vmem>>, %arg8: memref<1x128xf32, #tpu.memory_space<vmem>>, %arg9: memref<128x128xf32, #tpu.memory_space<vmem>>, %arg10: memref<32x128xf32, #tpu.memory_space<vmem>>, %arg11: memref<2x18x128xf32, #tpu.memory_space<vmem>>) attributes {dimension_semantics = [], scalar_prefetch = 0 : i64, scratch_operands = 1 : i64, tpu.core_type = #tpu.core_type<tc>} {
    %c0 = arith.constant 0 : index
    %c0_0 = arith.constant 0 : index
    %0 = vector.load %arg9[%c0, %c0_0] : memref<128x128xf32, #tpu.memory_space<vmem>>, vector<128x128xf32>
    %c0_1 = arith.constant 0 : index
    %c0_2 = arith.constant 0 : index
    %c0_3 = arith.constant 0 : index
    %1 = vector.load %arg0[%c0_1, %c0_2, %c0_3] : memref<2x18x64xf32, #tpu.memory_space<vmem>>, vector<2x16x64xf32>
    %2 = vector.shape_cast %1 : vector<2x16x64xf32> to vector<32x64xf32>
    %3 = arith.truncf %2 : vector<32x64xf32> to vector<32x64xbf16>
    %c0_4 = arith.constant 0 : index
    %c0_5 = arith.constant 0 : index
    %c0_6 = arith.constant 0 : index
    %4 = vector.load %arg1[%c0_4, %c0_5, %c0_6] : memref<3x64x128xbf16, #tpu.memory_space<vmem>>, vector<1x64x128xbf16>
    %5 = vector.shape_cast %4 : vector<1x64x128xbf16> to vector<64x128xbf16>
    %cst = arith.constant dense<0.000000e+00> : vector<32x128xf32>
    %6 = tpu.matmul %3, %5, %cst {dimension_numbers = #tpu.dot_dimension_numbers<[1], [0], [0], [1], [0, 0, 1, 1], [], []>} : vector<32x64xbf16>, vector<64x128xbf16>, vector<32x128xf32> -> vector<32x128xf32>
    %cst_7 = arith.constant 0.000000e+00 : f32
    %7 = vector.broadcast %cst_7 : f32 to vector<32x128xf32>
    %8 = arith.addf %7, %6 : vector<32x128xf32>
    %c0_8 = arith.constant 0 : index
    %c1 = arith.constant 1 : index
    %c0_9 = arith.constant 0 : index
    %9 = vector.load %arg0[%c0_8, %c1, %c0_9] : memref<2x18x64xf32, #tpu.memory_space<vmem>>, vector<2x16x64xf32>
    %10 = vector.shape_cast %9 : vector<2x16x64xf32> to vector<32x64xf32>
    %11 = arith.truncf %10 : vector<32x64xf32> to vector<32x64xbf16>
    %c1_10 = arith.constant 1 : index
    %c0_11 = arith.constant 0 : index
    %c0_12 = arith.constant 0 : index
    %12 = vector.load %arg1[%c1_10, %c0_11, %c0_12] : memref<3x64x128xbf16, #tpu.memory_space<vmem>>, vector<1x64x128xbf16>
    %13 = vector.shape_cast %12 : vector<1x64x128xbf16> to vector<64x128xbf16>
    %cst_13 = arith.constant dense<0.000000e+00> : vector<32x128xf32>
    %14 = tpu.matmul %11, %13, %cst_13 {dimension_numbers = #tpu.dot_dimension_numbers<[1], [0], [0], [1], [0, 0, 1, 1], [], []>} : vector<32x64xbf16>, vector<64x128xbf16>, vector<32x128xf32> -> vector<32x128xf32>
    %15 = arith.addf %8, %14 : vector<32x128xf32>
    %c0_14 = arith.constant 0 : index
    %c2 = arith.constant 2 : index
    %c0_15 = arith.constant 0 : index
    %16 = vector.load %arg0[%c0_14, %c2, %c0_15] : memref<2x18x64xf32, #tpu.memory_space<vmem>>, vector<2x16x64xf32>
    %17 = vector.shape_cast %16 : vector<2x16x64xf32> to vector<32x64xf32>
    %18 = arith.truncf %17 : vector<32x64xf32> to vector<32x64xbf16>
    %c2_16 = arith.constant 2 : index
    %c0_17 = arith.constant 0 : index
    %c0_18 = arith.constant 0 : index
    %19 = vector.load %arg1[%c2_16, %c0_17, %c0_18] : memref<3x64x128xbf16, #tpu.memory_space<vmem>>, vector<1x64x128xbf16>
    %20 = vector.shape_cast %19 : vector<1x64x128xbf16> to vector<64x128xbf16>
    %cst_19 = arith.constant dense<0.000000e+00> : vector<32x128xf32>
    %21 = tpu.matmul %18, %20, %cst_19 {dimension_numbers = #tpu.dot_dimension_numbers<[1], [0], [0], [1], [0, 0, 1, 1], [], []>} : vector<32x64xbf16>, vector<64x128xbf16>, vector<32x128xf32> -> vector<32x128xf32>
    %22 = arith.addf %15, %21 : vector<32x128xf32>
    %c0_20 = arith.constant 0 : index
    %c0_21 = arith.constant 0 : index
    %23 = vector.load %arg4[%c0_20, %c0_21] : memref<1x128xf32, #tpu.memory_space<vmem>>, vector<1x128xf32>
    %c0_22 = arith.constant 0 : index
    %c0_23 = arith.constant 0 : index
    %24 = vector.load %arg5[%c0_22, %c0_23] : memref<1x128xf32, #tpu.memory_space<vmem>>, vector<1x128xf32>
    %cst_24 = arith.constant dense<0.000000e+00> : vector<32x128xf32>
    %25 = tpu.matmul %22, %0, %cst_24 {dimension_numbers = #tpu.dot_dimension_numbers<[1], [0], [0], [1], [0, 0, 1, 1], [], []>} : vector<32x128xf32>, vector<128x128xf32>, vector<32x128xf32> -> vector<32x128xf32>
    %cst_25 = arith.constant dense<0.000000e+00> : vector<128xf32>
    %26 = vector.multi_reduction <add>, %25, %cst_25 [0] : vector<32x128xf32> to vector<128xf32>
    %27 = vector.shape_cast %26 : vector<128xf32> to vector<1x128xf32>
    %cst_26 = arith.constant 3.200000e+01 : f32
    %28 = vector.broadcast %cst_26 : f32 to vector<1x128xf32>
    %29 = arith.divf %27, %28 : vector<1x128xf32>
    %30 = vector.broadcast %29 : vector<1x128xf32> to vector<32x128xf32>
    %31 = arith.subf %22, %30 : vector<32x128xf32>
    %32 = arith.mulf %31, %31 : vector<32x128xf32>
    %cst_27 = arith.constant dense<0.000000e+00> : vector<32x128xf32>
    %33 = tpu.matmul %32, %0, %cst_27 {dimension_numbers = #tpu.dot_dimension_numbers<[1], [0], [0], [1], [0, 0, 1, 1], [], []>} : vector<32x128xf32>, vector<128x128xf32>, vector<32x128xf32> -> vector<32x128xf32>
    %cst_28 = arith.constant dense<0.000000e+00> : vector<128xf32>
    %34 = vector.multi_reduction <add>, %33, %cst_28 [0] : vector<32x128xf32> to vector<128xf32>
    %35 = vector.shape_cast %34 : vector<128xf32> to vector<1x128xf32>
    %cst_29 = arith.constant 3.200000e+01 : f32
    %36 = vector.broadcast %cst_29 : f32 to vector<1x128xf32>
    %37 = arith.divf %35, %36 : vector<1x128xf32>
    %cst_30 = arith.constant 9.99999974E-6 : f32
    %38 = vector.broadcast %cst_30 : f32 to vector<1x128xf32>
    %39 = arith.addf %37, %38 : vector<1x128xf32>
    %40 = math.rsqrt %39 : vector<1x128xf32>
    %41 = vector.broadcast %40 : vector<1x128xf32> to vector<32x128xf32>
    %42 = arith.mulf %31, %41 : vector<32x128xf32>
    %43 = vector.broadcast %23 : vector<1x128xf32> to vector<32x128xf32>
    %44 = arith.mulf %42, %43 : vector<32x128xf32>
    %45 = vector.broadcast %24 : vector<1x128xf32> to vector<32x128xf32>
    %46 = arith.addf %44, %45 : vector<32x128xf32>
    %cst_31 = arith.constant 0.000000e+00 : f32
    %47 = vector.broadcast %cst_31 : f32 to vector<32x128xf32>
    %48 = arith.maximumf %46, %47 : vector<32x128xf32>
    %cst_32 = arith.constant 0.000000e+00 : f32
    %49 = vector.broadcast %cst_32 : f32 to vector<2x18x128xf32>
    %c0_33 = arith.constant 0 : index
    %c0_34 = arith.constant 0 : index
    %c0_35 = arith.constant 0 : index
    %50 = vector.load %arg11[%c0_33, %c0_34, %c0_35] : memref<2x18x128xf32, #tpu.memory_space<vmem>>, vector<2x18x128xf32>
    tpu.vector_store %arg11[%c0_33, %c0_34, %c0_35], %49 {strides = array<i32>} : memref<2x18x128xf32, #tpu.memory_space<vmem>>, vector<2x18x128xf32>,
    %51 = vector.shape_cast %48 : vector<32x128xf32> to vector<2x16x128xf32>
    %c0_36 = arith.constant 0 : index
    %c1_37 = arith.constant 1 : index
    %c0_38 = arith.constant 0 : index
    %52 = vector.load %arg11[%c0_36, %c1_37, %c0_38] : memref<2x18x128xf32, #tpu.memory_space<vmem>>, vector<2x16x128xf32>
    tpu.vector_store %arg11[%c0_36, %c1_37, %c0_38], %51 {strides = array<i32>} : memref<2x18x128xf32, #tpu.memory_space<vmem>>, vector<2x16x128xf32>,
    %c0_39 = arith.constant 0 : index
    %c0_40 = arith.constant 0 : index
    %c0_41 = arith.constant 0 : index
    %53 = vector.load %arg11[%c0_39, %c0_40, %c0_41] : memref<2x18x128xf32, #tpu.memory_space<vmem>>, vector<2x16x128xf32>
    %54 = vector.shape_cast %53 : vector<2x16x128xf32> to vector<32x128xf32>
    %55 = arith.truncf %54 : vector<32x128xf32> to vector<32x128xbf16>
    %c0_42 = arith.constant 0 : index
    %c0_43 = arith.constant 0 : index
    %c0_44 = arith.constant 0 : index
    %56 = vector.load %arg2[%c0_42, %c0_43, %c0_44] : memref<3x128x128xbf16, #tpu.memory_space<vmem>>, vector<1x128x128xbf16>
    %57 = vector.shape_cast %56 : vector<1x128x128xbf16> to vector<128x128xbf16>
    %cst_45 = arith.constant dense<0.000000e+00> : vector<32x128xf32>
    %58 = tpu.matmul %55, %57, %cst_45 {dimension_numbers = #tpu.dot_dimension_numbers<[1], [0], [0], [1], [0, 0, 1, 1], [], []>} : vector<32x128xbf16>, vector<128x128xbf16>, vector<32x128xf32> -> vector<32x128xf32>
    %cst_46 = arith.constant 0.000000e+00 : f32
    %59 = vector.broadcast %cst_46 : f32 to vector<32x128xf32>
    %60 = arith.addf %59, %58 : vector<32x128xf32>
    %c0_47 = arith.constant 0 : index
    %c1_48 = arith.constant 1 : index
    %c0_49 = arith.constant 0 : index
    %61 = vector.load %arg11[%c0_47, %c1_48, %c0_49] : memref<2x18x128xf32, #tpu.memory_space<vmem>>, vector<2x16x128xf32>
    %62 = vector.shape_cast %61 : vector<2x16x128xf32> to vector<32x128xf32>
    %63 = arith.truncf %62 : vector<32x128xf32> to vector<32x128xbf16>
    %c1_50 = arith.constant 1 : index
    %c0_51 = arith.constant 0 : index
    %c0_52 = arith.constant 0 : index
    %64 = vector.load %arg2[%c1_50, %c0_51, %c0_52] : memref<3x128x128xbf16, #tpu.memory_space<vmem>>, vector<1x128x128xbf16>
    %65 = vector.shape_cast %64 : vector<1x128x128xbf16> to vector<128x128xbf16>
    %cst_53 = arith.constant dense<0.000000e+00> : vector<32x128xf32>
    %66 = tpu.matmul %63, %65, %cst_53 {dimension_numbers = #tpu.dot_dimension_numbers<[1], [0], [0], [1], [0, 0, 1, 1], [], []>} : vector<32x128xbf16>, vector<128x128xbf16>, vector<32x128xf32> -> vector<32x128xf32>
    %67 = arith.addf %60, %66 : vector<32x128xf32>
    %c0_54 = arith.constant 0 : index
    %c2_55 = arith.constant 2 : index
    %c0_56 = arith.constant 0 : index
    %68 = vector.load %arg11[%c0_54, %c2_55, %c0_56] : memref<2x18x128xf32, #tpu.memory_space<vmem>>, vector<2x16x128xf32>
    %69 = vector.shape_cast %68 : vector<2x16x128xf32> to vector<32x128xf32>
    %70 = arith.truncf %69 : vector<32x128xf32> to vector<32x128xbf16>
    %c2_57 = arith.constant 2 : index
    %c0_58 = arith.constant 0 : index
    %c0_59 = arith.constant 0 : index
    %71 = vector.load %arg2[%c2_57, %c0_58, %c0_59] : memref<3x128x128xbf16, #tpu.memory_space<vmem>>, vector<1x128x128xbf16>
    %72 = vector.shape_cast %71 : vector<1x128x128xbf16> to vector<128x128xbf16>
    %cst_60 = arith.constant dense<0.000000e+00> : vector<32x128xf32>
    %73 = tpu.matmul %70, %72, %cst_60 {dimension_numbers = #tpu.dot_dimension_numbers<[1], [0], [0], [1], [0, 0, 1, 1], [], []>} : vector<32x128xbf16>, vector<128x128xbf16>, vector<32x128xf32> -> vector<32x128xf32>
    %74 = arith.addf %67, %73 : vector<32x128xf32>
    %c0_61 = arith.constant 0 : index
    %c0_62 = arith.constant 0 : index
    %75 = vector.load %arg6[%c0_61, %c0_62] : memref<1x128xf32, #tpu.memory_space<vmem>>, vector<1x128xf32>
    %c0_63 = arith.constant 0 : index
    %c0_64 = arith.constant 0 : index
    %76 = vector.load %arg7[%c0_63, %c0_64] : memref<1x128xf32, #tpu.memory_space<vmem>>, vector<1x128xf32>
    %cst_65 = arith.constant dense<0.000000e+00> : vector<32x128xf32>
    %77 = tpu.matmul %74, %0, %cst_65 {dimension_numbers = #tpu.dot_dimension_numbers<[1], [0], [0], [1], [0, 0, 1, 1], [], []>} : vector<32x128xf32>, vector<128x128xf32>, vector<32x128xf32> -> vector<32x128xf32>
    %cst_66 = arith.constant dense<0.000000e+00> : vector<128xf32>
    %78 = vector.multi_reduction <add>, %77, %cst_66 [0] : vector<32x128xf32> to vector<128xf32>
    %79 = vector.shape_cast %78 : vector<128xf32> to vector<1x128xf32>
    %cst_67 = arith.constant 3.200000e+01 : f32
    %80 = vector.broadcast %cst_67 : f32 to vector<1x128xf32>
    %81 = arith.divf %79, %80 : vector<1x128xf32>
    %82 = vector.broadcast %81 : vector<1x128xf32> to vector<32x128xf32>
    %83 = arith.subf %74, %82 : vector<32x128xf32>
    %84 = arith.mulf %83, %83 : vector<32x128xf32>
    %cst_68 = arith.constant dense<0.000000e+00> : vector<32x128xf32>
    %85 = tpu.matmul %84, %0, %cst_68 {dimension_numbers = #tpu.dot_dimension_numbers<[1], [0], [0], [1], [0, 0, 1, 1], [], []>} : vector<32x128xf32>, vector<128x128xf32>, vector<32x128xf32> -> vector<32x128xf32>
    %cst_69 = arith.constant dense<0.000000e+00> : vector<128xf32>
    %86 = vector.multi_reduction <add>, %85, %cst_69 [0] : vector<32x128xf32> to vector<128xf32>
    %87 = vector.shape_cast %86 : vector<128xf32> to vector<1x128xf32>
    %cst_70 = arith.constant 3.200000e+01 : f32
    %88 = vector.broadcast %cst_70 : f32 to vector<1x128xf32>
    %89 = arith.divf %87, %88 : vector<1x128xf32>
    %cst_71 = arith.constant 9.99999974E-6 : f32
    %90 = vector.broadcast %cst_71 : f32 to vector<1x128xf32>
    %91 = arith.addf %89, %90 : vector<1x128xf32>
    %92 = math.rsqrt %91 : vector<1x128xf32>
    %93 = vector.broadcast %92 : vector<1x128xf32> to vector<32x128xf32>
    %94 = arith.mulf %83, %93 : vector<32x128xf32>
    %95 = vector.broadcast %75 : vector<1x128xf32> to vector<32x128xf32>
    %96 = arith.mulf %94, %95 : vector<32x128xf32>
    %97 = vector.broadcast %76 : vector<1x128xf32> to vector<32x128xf32>
    %98 = arith.addf %96, %97 : vector<32x128xf32>
    %c0_72 = arith.constant 0 : index
    %c1_73 = arith.constant 1 : index
    %c0_74 = arith.constant 0 : index
    %99 = vector.load %arg0[%c0_72, %c1_73, %c0_74] : memref<2x18x64xf32, #tpu.memory_space<vmem>>, vector<2x16x64xf32>
    %100 = vector.shape_cast %99 : vector<2x16x64xf32> to vector<32x64xf32>
    %101 = arith.truncf %100 : vector<32x64xf32> to vector<32x64xbf16>
    %c0_75 = arith.constant 0 : index
    %c0_76 = arith.constant 0 : index
    %102 = vector.load %arg3[%c0_75, %c0_76] : memref<64x128xbf16, #tpu.memory_space<vmem>>, vector<64x128xbf16>
    %cst_77 = arith.constant dense<0.000000e+00> : vector<32x128xf32>
    %103 = tpu.matmul %101, %102, %cst_77 {dimension_numbers = #tpu.dot_dimension_numbers<[1], [0], [0], [1], [0, 0, 1, 1], [], []>} : vector<32x64xbf16>, vector<64x128xbf16>, vector<32x128xf32> -> vector<32x128xf32>
    %c0_78 = arith.constant 0 : index
    %c0_79 = arith.constant 0 : index
    %104 = vector.load %arg8[%c0_78, %c0_79] : memref<1x128xf32, #tpu.memory_space<vmem>>, vector<1x128xf32>
    %105 = vector.broadcast %104 : vector<1x128xf32> to vector<32x128xf32>
    %106 = arith.addf %103, %105 : vector<32x128xf32>
    %107 = arith.addf %98, %106 : vector<32x128xf32>
    %cst_80 = arith.constant 0.000000e+00 : f32
    %108 = vector.broadcast %cst_80 : f32 to vector<32x128xf32>
    %109 = arith.maximumf %107, %108 : vector<32x128xf32>
    %c0_81 = arith.constant 0 : index
    %c0_82 = arith.constant 0 : index
    %110 = vector.load %arg10[%c0_81, %c0_82] : memref<32x128xf32, #tpu.memory_space<vmem>>, vector<32x128xf32>
    tpu.vector_store %arg10[%c0_81, %c0_82], %109 {strides = array<i32>} : memref<32x128xf32, #tpu.memory_space<vmem>>, vector<32x128xf32>,
    return
  }
}

</mosaic_0001>

<llo_original>
// kernel: tile.28
$region0: #{tile.28}
  #allocation0 [shape = 's32[1]{0}', space=sflag, size = 0x4, scoped, tag = 'scoped memory for tile.28']
  %s0 = inlined_call_operand.vmem [shape: f32[8], index: 0, kind: input, shape index: {}]
  %s1 = inlined_call_operand.vmem [shape: f32[16,8], index: 1, kind: output, shape index: {}]
  // Predicated region
  $region2: #{tile.28} parent=0 // pred_check
    _
  $region3: #{tile.28} parent=0 // pred_check_branch
    %3 = sbr.rel (0) target = $region5
  $region4: #{tile.28} parent=0 // pred_region
    _
  $region5: #{tile.28} parent=0 // pred_fallthru
    _
  %v4 = vld [vmem:[%s0] ss:$0 sm:$0xff]
  %5 = vst [vmem:[%s1] sm:$0xff] %v4
  %s6 = scalar_lea.vmem %s1, 8
  %7 = vst [vmem:[%s6] sm:$0xff] %v4

// kernel: tile.29
$region0: #{tile.29}
  %s0 = inlined_call_operand.vmem [shape: f32[16,8], index: 0, kind: input, shape index: {}]
  %s1 = inlined_call_operand.vmem [shape: f32[1,128], index: 1, kind: output, shape index: {}]
  $region1: #{tile.29} parent=0
    #allocation0 [shape = 'u8[4096]{0}', space=vmem, size = 0x1000, scoped, tag = 'scoped mem for output reshape']
    %v2 = vld [vmem:[%s0] sm:$0x1]
    %vm3 = vcmask 64512
    %4 = vst.msk [vmem:[#allocation0] sm:$0x1] %vm3, %v2
    %s5 = scalar_lea.vmem %s0, 15
    %v6 = vld [vmem:[%s5] sm:$0x1]
    %7 = vrot.lane.b32.xlu0 %v6, 120
    %v8 = vpop.permute.xlu0 %7
    %vm9 = vcmask 1048512
    %10 = vst.msk [vmem:[#allocation0] sm:$0x1] %vm9, %v8
    %s11 = scalar_lea.vmem %s0, 14
    %v12 = vld [vmem:[%s11] sm:$0x1]
    %13 = vrot.lane.b32.xlu0 %v12, 112
    %v14 = vpop.permute.xlu0 %13
    %vm15 = vcmask 982912
    %16 = vst.msk [vmem:[#allocation0] sm:$0x1] %vm15, %v14
    %s17 = scalar_lea.vmem %s0, 13
    %v18 = vld [vmem:[%s17] sm:$0x1]
    %19 = vrot.lane.b32.xlu0 %v18, 104
    %v20 = vpop.permute.xlu0 %19
    %vm21 = vcmask 917312
    %22 = vst.msk [vmem:[#allocation0] sm:$0x1] %vm21, %v20
    %s23 = scalar_lea.vmem %s0, 12
    %v24 = vld [vmem:[%s23] sm:$0x1]
    %25 = vrot.lane.b32.xlu0 %v24, 96
    %v26 = vpop.permute.xlu0 %25
    %vm27 = vcmask 851712
    %28 = vst.msk [vmem:[#allocation0] sm:$0x1] %vm27, %v26
    %s29 = scalar_lea.vmem %s0, 11
    %v30 = vld [vmem:[%s29] sm:$0x1]
    %31 = vrot.lane.b32.xlu0 %v30, 88
    %v32 = vpop.permute.xlu0 %31
    %vm33 = vcmask 786112
    %34 = vst.msk [vmem:[#allocation0] sm:$0x1] %vm33, %v32
    %s35 = scalar_lea.vmem %s0, 10
    %v36 = vld [vmem:[%s35] sm:$0x1]
    %37 = vrot.lane.b32.xlu0 %v36, 80
    %v38 = vpop.permute.xlu0 %37
    %vm39 = vcmask 720512
    %40 = vst.msk [vmem:[#allocation0] sm:$0x1] %vm39, %v38
    %s41 = scalar_lea.vmem %s0, 9
    %v42 = vld [vmem:[%s41] sm:$0x1]
    %43 = vrot.lane.b32.xlu0 %v42, 72
    %v44 = vpop.permute.xlu0 %43
    %vm45 = vcmask 654912
    %46 = vst.msk [vmem:[#allocation0] sm:$0x1] %vm45, %v44
    %s47 = scalar_lea.vmem %s0, 8
    %v48 = vld [vmem:[%s47] sm:$0x1]
    %49 = vrot.lane.b32.xlu0 %v48, 64
    %v50 = vpop.permute.xlu0 %49
    %vm51 = vcmask 589312
    %52 = vst.msk [vmem:[#allocation0] sm:$0x1] %vm51, %v50
    %s53 = scalar_lea.vmem %s0, 7
    %v54 = vld [vmem:[%s53] sm:$0x1]
    %55 = vrot.lane.b32.xlu0 %v54, 56
    %v56 = vpop.permute.xlu0 %55
    %vm57 = vcmask 523712
    %58 = vst.msk [vmem:[#allocation0] sm:$0x1] %vm57, %v56
    %s59 = scalar_lea.vmem %s0, 6
    %v60 = vld [vmem:[%s59] sm:$0x1]
    %61 = vrot.lane.b32.xlu0 %v60, 48
    %v62 = vpop.permute.xlu0 %61
    %vm63 = vcmask 458112
    %64 = vst.msk [vmem:[#allocation0] sm:$0x1] %vm63, %v62
    %s65 = scalar_lea.vmem %s0, 5
    %v66 = vld [vmem:[%s65] sm:$0x1]
    %67 = vrot.lane.b32.xlu0 %v66, 40
    %v68 = vpop.permute.xlu0 %67
    %vm69 = vcmask 392512
    %70 = vst.msk [vmem:[#allocation0] sm:$0x1] %vm69, %v68
    %s71 = scalar_lea.vmem %s0, 4
    %v72 = vld [vmem:[%s71] sm:$0x1]
    %73 = vrot.lane.b32.xlu0 %v72, 32
    %v74 = vpop.permute.xlu0 %73
    %vm75 = vcmask 326912
    %76 = vst.msk [vmem:[#allocation0] sm:$0x1] %vm75, %v74
    %s77 = scalar_lea.vmem %s0, 3
    %v78 = vld [vmem:[%s77] sm:$0x1]
    %79 = vrot.lane.b32.xlu0 %v78, 24
    %v80 = vpop.permute.xlu0 %79
    %vm81 = vcmask 261312
    %82 = vst.msk [vmem:[#allocation0] sm:$0x1] %vm81, %v80
    %s83 = scalar_lea.vmem %s0, 2
    %v84 = vld [vmem:[%s83] sm:$0x1]
    %85 = vrot.lane.b32.xlu0 %v84, 16
    %v86 = vpop.permute.xlu0 %85
    %vm87 = vcmask 195712
    %88 = vst.msk [vmem:[#allocation0] sm:$0x1] %vm87, %v86
    %s89 = scalar_lea.vmem %s0, 1
    %v90 = vld [vmem:[%s89] sm:$0x1]
    %91 = vrot.lane.b32.xlu0 %v90, 8
    %v92 = vpop.permute.xlu0 %91
    %vm93 = vcmask 130112
    %94 = vst.msk [vmem:[#allocation0] sm:$0x1] %vm93, %v92
    %s96 = ssub.s32 2, 1
    %v97 = vld [vmem:[#allocation0] sm:%s96]
    %s99 = ssub.s32 2, 1
    %100 = vst [vmem:[%s1] sm:%s99] %v97

// kernel: residual_forward.1
$region0: #{residual_forward.1}
  #allocation0 [shape = 'u32[]', space=smem, size = 0x4, offset = 0x4, fixed_abs, tag = 'smem constant byte address 0x4 - core index']
  #allocation1 [shape = 'u32[72,128]{1,0:T(1,128)}', space=vmem, size = 0x9000, scoped, tag = 'internal scratch']
  #allocation2 [shape = 'f32[2,18,128]{2,1,0:T(8,128)}', space=vmem, size = 0x6000, scoped, tag = 'scratch operand']
  %s0 = inlined_call_operand.vmem [shape: f32[2,18,64], index: 0, kind: input, shape index: {}]
  %s1 = inlined_call_operand.vmem [shape: bf16[3,64,128], index: 1, kind: input, shape index: {}]
  %s2 = inlined_call_operand.vmem [shape: bf16[3,128,128], index: 2, kind: input, shape index: {}]
  %s3 = inlined_call_operand.vmem [shape: bf16[64,128], index: 3, kind: input, shape index: {}]
  %s4 = inlined_call_operand.vmem [shape: f32[1,128], index: 4, kind: input, shape index: {}]
  %s5 = inlined_call_operand.vmem [shape: f32[1,128], index: 5, kind: input, shape index: {}]
  %s6 = inlined_call_operand.vmem [shape: f32[1,128], index: 6, kind: input, shape index: {}]
  %s7 = inlined_call_operand.vmem [shape: f32[1,128], index: 7, kind: input, shape index: {}]
  %s8 = inlined_call_operand.vmem [shape: f32[1,128], index: 8, kind: input, shape index: {}]
  %s9 = inlined_call_operand.vmem [shape: f32[128,128], index: 9, kind: input, shape index: {}]
  %s10 = inlined_call_operand.vmem [shape: f32[32,128], index: 10, kind: output, shape index: {}]
  %s11 = sld [smem:[#allocation0]]
  $region50: #{residual_forward.1} parent=0
    _
  %s13 = ssub.s32 1, %s11
  %s14 = scalar_select 0, %s13, %s11
  // Predicated region
  $region2: #{residual_forward.1} parent=0 // pred_check
    _
  $region3: #{residual_forward.1} parent=0 // pred_check_branch
    %16 = sbr.rel (0) target = $region5
  $region4: #{residual_forward.1} parent=0 // pred_region
    _
  $region5: #{residual_forward.1} parent=0 // pred_fallthru
    _
  // Predicated region
  $region6: #{residual_forward.1} parent=0 // pred_check
    _
  $region7: #{residual_forward.1} parent=0 // pred_check_branch
    %18 = sbr.rel (0) target = $region9
  $region8: #{residual_forward.1} parent=0 // pred_region
    _
  $region9: #{residual_forward.1} parent=0 // pred_fallthru
    _
  // Predicated region
  $region10: #{residual_forward.1} parent=0 // pred_check
    _
  $region11: #{residual_forward.1} parent=0 // pred_check_branch
    %20 = sbr.rel (0) target = $region13
  $region12: #{residual_forward.1} parent=0 // pred_region
    _
  $region13: #{residual_forward.1} parent=0 // pred_fallthru
    _
  // Predicated region
  $region14: #{residual_forward.1} parent=0 // pred_check
    _
  $region15: #{residual_forward.1} parent=0 // pred_check_branch
    %22 = sbr.rel (0) target = $region17
  $region16: #{residual_forward.1} parent=0 // pred_region
    _
  $region17: #{residual_forward.1} parent=0 // pred_fallthru
    _
  // Predicated region
  $region18: #{residual_forward.1} parent=0 // pred_check
    _
  $region19: #{residual_forward.1} parent=0 // pred_check_branch
    %24 = sbr.rel (0) target = $region21
  $region20: #{residual_forward.1} parent=0 // pred_region
    _
  $region21: #{residual_forward.1} parent=0 // pred_fallthru
    _
  // Predicated region
  $region22: #{residual_forward.1} parent=0 // pred_check
    _
  $region23: #{residual_forward.1} parent=0 // pred_check_branch
    %26 = sbr.rel (0) target = $region25
  $region24: #{residual_forward.1} parent=0 // pred_region
    _
  $region25: #{residual_forward.1} parent=0 // pred_fallthru
    _
  // Predicated region
  $region26: #{residual_forward.1} parent=0 // pred_check
    _
  $region27: #{residual_forward.1} parent=0 // pred_check_branch
    %28 = sbr.rel (0) target = $region29
  $region28: #{residual_forward.1} parent=0 // pred_region
    _
  $region29: #{residual_forward.1} parent=0 // pred_fallthru
    _
  // Predicated region
  $region30: #{residual_forward.1} parent=0 // pred_check
    _
  $region31: #{residual_forward.1} parent=0 // pred_check_branch
    %30 = sbr.rel (0) target = $region33
  $region32: #{residual_forward.1} parent=0 // pred_region
    _
  $region33: #{residual_forward.1} parent=0 // pred_fallthru
    _
  // Predicated region
  $region34: #{residual_forward.1} parent=0 // pred_check
    _
  $region35: #{residual_forward.1} parent=0 // pred_check_branch
    %32 = sbr.rel (0) target = $region37
  $region36: #{residual_forward.1} parent=0 // pred_region
    _
  $region37: #{residual_forward.1} parent=0 // pred_fallthru
    _
  // Predicated region
  $region38: #{residual_forward.1} parent=0 // pred_check
    _
  $region39: #{residual_forward.1} parent=0 // pred_check_branch
    %34 = sbr.rel (0) target = $region41
  $region40: #{residual_forward.1} parent=0 // pred_region
    _
  $region41: #{residual_forward.1} parent=0 // pred_fallthru
    _
  %v36 = vld [vmem:[%s9] sm:$0xff]
  %v37 = vld [vmem:[%s9 + $0x8] sm:$0xff]
  %v38 = vld [vmem:[%s9 + $0x10] sm:$0xff]
  %v39 = vld [vmem:[%s9 + $0x18] sm:$0xff]
  %v40 = vld [vmem:[%s9 + $0x20] sm:$0xff]
  %v41 = vld [vmem:[%s9 + $0x28] sm:$0xff]
  %v42 = vld [vmem:[%s9 + $0x30] sm:$0xff]
  %v43 = vld [vmem:[%s9 + $0x38] sm:$0xff]
  %v44 = vld [vmem:[%s9 + $0x40] sm:$0xff]
  %v45 = vld [vmem:[%s9 + $0x48] sm:$0xff]
  %v46 = vld [vmem:[%s9 + $0x50] sm:$0xff]
  %v47 = vld [vmem:[%s9 + $0x58] sm:$0xff]
  %v48 = vld [vmem:[%s9 + $0x60] sm:$0xff]
  %v49 = vld [vmem:[%s9 + $0x68] sm:$0xff]
  %v50 = vld [vmem:[%s9 + $0x70] sm:$0xff]
  %v51 = vld [vmem:[%s9 + $0x78] sm:$0xff]
  %v52 = vld [vmem:[%s0] sm:$0xff]
  %v53 = vld [vmem:[%s0 + $0x8] sm:$0xff]
  %v54 = vld [vmem:[%s0 + $0x18] sm:$0xff]
  %v55 = vld [vmem:[%s0 + $0x20] sm:$0xff]
  %v56 = vpack.c.bf16 %v53, %v52
  %v57 = vpack.c.bf16 %v55, %v54
  %v58 = vld [vmem:[%s1] sm:$0xf]
  %v59 = vld [vmem:[%s1 + $0x4] sm:$0xf]
  %v60 = vld [vmem:[%s1 + $0x8] sm:$0xf]
  %v61 = vld [vmem:[%s1 + $0xc] sm:$0xf]
  %v62 = vld [vmem:[%s1 + $0x10] sm:$0xf]
  %v63 = vld [vmem:[%s1 + $0x14] sm:$0xf]
  %v64 = vld [vmem:[%s1 + $0x18] sm:$0xf]
  %v65 = vld [vmem:[%s1 + $0x1c] sm:$0xf]
  %v66 = vld [vmem:[%s0 + $0x1] sm:$0xff]
  %v67 = vld [vmem:[%s0 + $0x9] sm:$0xff]
  %v68 = vld [vmem:[%s0 + $0x19] sm:$0xff]
  %v69 = vld [vmem:[%s0 + $0x21] sm:$0xff]
  %v70 = vpack.c.bf16 %v67, %v66
  %v71 = vpack.c.bf16 %v69, %v68
  %s72 = scalar_lea.vmem %s1, 32
  %v73 = vld [vmem:[%s72] sm:$0xf]
  %v74 = vld [vmem:[%s72 + $0x4] sm:$0xf]
  %v75 = vld [vmem:[%s72 + $0x8] sm:$0xf]
  %v76 = vld [vmem:[%s72 + $0xc] sm:$0xf]
  %v77 = vld [vmem:[%s72 + $0x10] sm:$0xf]
  %v78 = vld [vmem:[%s72 + $0x14] sm:$0xf]
  %v79 = vld [vmem:[%s72 + $0x18] sm:$0xf]
  %v80 = vld [vmem:[%s72 + $0x1c] sm:$0xf]
  %v89 = vunpack.c.l.b16 %v73
  %v90 = vunpack.c.l.b16 %v74
  %v91 = vunpack.c.l.b16 %v75
  %v92 = vunpack.c.l.b16 %v76
  %v93 = vunpack.c.l.b16 %v77
  %v94 = vunpack.c.l.b16 %v78
  %v95 = vunpack.c.l.b16 %v79
  %v96 = vunpack.c.l.b16 %v80
  %v97 = vpack.c.b16 %v90, %v89
  %v98 = vpack.c.b16 %v92, %v91
  %v99 = vpack.c.b16 %v94, %v93
  %v100 = vpack.c.b16 %v96, %v95
  %vm105 = vcmask 523264
  %v107 = vsel %vm105, %v70, 0
  %v110 = vsel %vm105, %v71, 0
  %112 = vmatpush.bf16.msra.mxu0 0
  %113 = vmatpush.bf16.msra.mxu0 0
  %114 = vmatpush.bf16.msra.mxu0 0
  %115 = vmatpush.bf16.msra.mxu0 0
  %116 = vmatpush.bf16.msra.mxu0 %v100
  %117 = vmatpush.bf16.msra.mxu0 %v99
  %118 = vmatpush.bf16.msra.mxu0 %v98
  %119 = vmatpush.bf16.msra.mxu0 %v97
  %120 = vmatmul.bf16.gmra.mxu0 %v107
  %v121 = vpop.f32.mrf.mxu0
  %v122 = vadd.f32 0.0, %v121
  %v123 = vpop.f32.mrf.mxu0
  %v124 = vadd.f32 0.0, %v123
  %125 = vmatmul.bf16.gmra.mxu0 %v110
  %v126 = vpop.f32.mrf.mxu0
  %v127 = vadd.f32 0.0, %v126
  %v128 = vpop.f32.mrf.mxu0
  %v129 = vadd.f32 0.0, %v128
  %130 = vdwg.mxu0
  %v139 = vunpack.c.l.b16 %v58
  %v140 = vunpack.c.l.b16 %v59
  %v141 = vunpack.c.l.b16 %v60
  %v142 = vunpack.c.l.b16 %v61
  %v143 = vunpack.c.l.b16 %v62
  %v144 = vunpack.c.l.b16 %v63
  %v145 = vunpack.c.l.b16 %v64
  %v146 = vunpack.c.l.b16 %v65
  %v147 = vpack.c.b16 %v140, %v139
  %v148 = vpack.c.b16 %v142, %v141
  %v149 = vpack.c.b16 %v144, %v143
  %v150 = vpack.c.b16 %v146, %v145
  %v156 = vsel %vm105, %v56, 0
  %v159 = vsel %vm105, %v57, 0
  %161 = vmatpush.bf16.msra.mxu0 0
  %162 = vmatpush.bf16.msra.mxu0 0
  %163 = vmatpush.bf16.msra.mxu0 0
  %164 = vmatpush.bf16.msra.mxu0 0
  %165 = vmatpush.bf16.msra.mxu0 %v150
  %166 = vmatpush.bf16.msra.mxu0 %v149
  %167 = vmatpush.bf16.msra.mxu0 %v148
  %168 = vmatpush.bf16.msra.mxu0 %v147
  %169 = vmatmul.bf16.gmra.mxu0 %v156
  %v170 = vpop.f32.mrf.mxu0
  %v171 = vadd.f32 %v122, %v170
  %v172 = vpop.f32.mrf.mxu0
  %v173 = vadd.f32 %v124, %v172
  %174 = vmatmul.bf16.gmra.mxu0 %v159
  %v175 = vpop.f32.mrf.mxu0
  %v176 = vadd.f32 %v127, %v175
  %v177 = vpop.f32.mrf.mxu0
  %v178 = vadd.f32 %v129, %v177
  %179 = vdwg.mxu0
  %v180 = vld [vmem:[%s0 + $0x2] sm:$0xff]
  %v181 = vld [vmem:[%s0 + $0xa] sm:$0xff]
  %v182 = vld [vmem:[%s0 + $0x1a] sm:$0xff]
  %v183 = vld [vmem:[%s0 + $0x22] sm:$0xff]
  %v184 = vpack.c.bf16 %v181, %v180
  %v185 = vpack.c.bf16 %v183, %v182
  %s186 = scalar_lea.vmem %s1, 64
  %v187 = vld [vmem:[%s186] sm:$0xf]
  %v188 = vld [vmem:[%s186 + $0x4] sm:$0xf]
  %v189 = vld [vmem:[%s186 + $0x8] sm:$0xf]
  %v190 = vld [vmem:[%s186 + $0xc] sm:$0xf]
  %v191 = vld [vmem:[%s186 + $0x10] sm:$0xf]
  %v192 = vld [vmem:[%s186 + $0x14] sm:$0xf]
  %v193 = vld [vmem:[%s186 + $0x18] sm:$0xf]
  %v194 = vld [vmem:[%s186 + $0x1c] sm:$0xf]
  %v203 = vunpack.c.l.b16 %v187
  %v204 = vunpack.c.l.b16 %v188
  %v205 = vunpack.c.l.b16 %v189
  %v206 = vunpack.c.l.b16 %v190
  %v207 = vunpack.c.l.b16 %v191
  %v208 = vunpack.c.l.b16 %v192
  %v209 = vunpack.c.l.b16 %v193
  %v210 = vunpack.c.l.b16 %v194
  %v211 = vpack.c.b16 %v204, %v203
  %v212 = vpack.c.b16 %v206, %v205
  %v213 = vpack.c.b16 %v208, %v207
  %v214 = vpack.c.b16 %v210, %v209
  %v220 = vsel %vm105, %v184, 0
  %v223 = vsel %vm105, %v185, 0
  %225 = vmatpush.bf16.msra.mxu0 0
  %226 = vmatpush.bf16.msra.mxu0 0
  %227 = vmatpush.bf16.msra.mxu0 0
  %228 = vmatpush.bf16.msra.mxu0 0
  %229 = vmatpush.bf16.msra.mxu0 %v214
  %230 = vmatpush.bf16.msra.mxu0 %v213
  %231 = vmatpush.bf16.msra.mxu0 %v212
  %232 = vmatpush.bf16.msra.mxu0 %v211
  %233 = vmatmul.bf16.gmra.mxu0 %v220
  %v234 = vpop.f32.mrf.mxu0
  %v235 = vadd.f32 0.0, %v234
  %v236 = vpop.f32.mrf.mxu0
  %v237 = vadd.f32 0.0, %v236
  %238 = vmatmul.bf16.gmra.mxu0 %v223
  %v239 = vpop.f32.mrf.mxu0
  %v240 = vadd.f32 0.0, %v239
  %v241 = vpop.f32.mrf.mxu0
  %v242 = vadd.f32 0.0, %v241
  %243 = vdwg.mxu0
  %v244 = vadd.f32 %v171, %v235
  %v245 = vadd.f32 %v173, %v237
  %v246 = vadd.f32 %v176, %v240
  %v247 = vadd.f32 %v178, %v242
  %v248 = vld [vmem:[%s4] sm:$0x1]
  %v249 = vld [vmem:[%s5] sm:$0x1]
  %250 = vmatpush.msra.mxu0 %v51
  %251 = vmatpush.msra.mxu0 %v50
  %252 = vmatpush.msra.mxu0 %v49
  %253 = vmatpush.msra.mxu0 %v48
  %254 = vmatpush.msra.mxu0 %v47
  %255 = vmatpush.msra.mxu0 %v46
  %256 = vmatpush.msra.mxu0 %v45
  %257 = vmatpush.msra.mxu0 %v44
  %258 = vmatpush.msra.mxu0 %v43
  %259 = vmatpush.msra.mxu0 %v42
  %260 = vmatpush.msra.mxu0 %v41
  %261 = vmatpush.msra.mxu0 %v40
  %262 = vmatpush.msra.mxu0 %v39
  %263 = vmatpush.msra.mxu0 %v38
  %264 = vmatpush.msra.mxu0 %v37
  %265 = vmatpush.msra.mxu0 %v36
  %266 = vmatmul.f32.gmra.mxu0 %v244
  %v267 = vpop.f32.mrf.mxu0
  %v268 = vadd.f32 0.0, %v267
  %269 = vmatmul.f32.gmra.mxu0 %v245
  %v270 = vpop.f32.mrf.mxu0
  %v271 = vadd.f32 0.0, %v270
  %272 = vmatmul.f32.gmra.mxu0 %v246
  %v273 = vpop.f32.mrf.mxu0
  %v274 = vadd.f32 0.0, %v273
  %275 = vmatmul.f32.gmra.mxu0 %v247
  %v276 = vpop.f32.mrf.mxu0
  %v277 = vadd.f32 0.0, %v276
  %278 = vdwg.mxu0
  %v279 = vadd.f32 %v268, %v271
  %v280 = vadd.f32 %v279, %v274
  %v281 = vadd.f32 %v280, %v277
  %v282 = vrot.slane %v281, 4
  %v283 = vadd.f32 %v281, %v282
  %v284 = vrot.slane %v283, 2
  %v285 = vadd.f32 %v283, %v284
  %v286 = vrot.slane %v285, 1
  %v287 = vadd.f32 %v285, %v286
  %v288 = vrcp.pop 32.0
  %v289 = vmul.f32 32.0, %v288
  %v290 = vsub.f32 1.0, %v289
  %v291 = vmul.f32 %v288, %v290
  %v292 = vadd.f32 %v288, %v291
  %vm293 = vweird.f32 %v288
  %v294 = vsel %vm293, %v288, %v292
  %v295 = vmul.f32 %v287, %v294
  %v296 = vsub.f32 %v244, %v295
  %v297 = vsub.f32 %v245, %v295
  %v298 = vsub.f32 %v246, %v295
  %v299 = vsub.f32 %v247, %v295
  %v300 = vmul.f32 %v296, %v296
  %v301 = vmul.f32 %v297, %v297
  %v302 = vmul.f32 %v298, %v298
  %v303 = vmul.f32 %v299, %v299
  %304 = vmatpush.msra.mxu0 %v51
  %305 = vmatpush.msra.mxu0 %v50
  %306 = vmatpush.msra.mxu0 %v49
  %307 = vmatpush.msra.mxu0 %v48
  %308 = vmatpush.msra.mxu0 %v47
  %309 = vmatpush.msra.mxu0 %v46
  %310 = vmatpush.msra.mxu0 %v45
  %311 = vmatpush.msra.mxu0 %v44
  %312 = vmatpush.msra.mxu0 %v43
  %313 = vmatpush.msra.mxu0 %v42
  %314 = vmatpush.msra.mxu0 %v41
  %315 = vmatpush.msra.mxu0 %v40
  %316 = vmatpush.msra.mxu0 %v39
  %317 = vmatpush.msra.mxu0 %v38
  %318 = vmatpush.msra.mxu0 %v37
  %319 = vmatpush.msra.mxu0 %v36
  %320 = vmatmul.f32.gmra.mxu0 %v300
  %v321 = vpop.f32.mrf.mxu0
  %v322 = vadd.f32 0.0, %v321
  %323 = vmatmul.f32.gmra.mxu0 %v301
  %v324 = vpop.f32.mrf.mxu0
  %v325 = vadd.f32 0.0, %v324
  %326 = vmatmul.f32.gmra.mxu0 %v302
  %v327 = vpop.f32.mrf.mxu0
  %v328 = vadd.f32 0.0, %v327
  %329 = vmatmul.f32.gmra.mxu0 %v303
  %v330 = vpop.f32.mrf.mxu0
  %v331 = vadd.f32 0.0, %v330
  %332 = vdwg.mxu0
  %v333 = vadd.f32 %v322, %v325
  %v334 = vadd.f32 %v333, %v328
  %v335 = vadd.f32 %v334, %v331
  %v336 = vrot.slane %v335, 4
  %v337 = vadd.f32 %v335, %v336
  %v338 = vrot.slane %v337, 2
  %v339 = vadd.f32 %v337, %v338
  %v340 = vrot.slane %v339, 1
  %v341 = vadd.f32 %v339, %v340
  %v342 = vmul.f32 %v341, %v294
  %v343 = vadd.f32 %v342, 1e-05
  %v344 = vrsqrt.pop %v343
  %v345 = vmul.f32 %v344, %v343
  %v346 = vmul.f32 %v345, %v344
  %v347 = vmul.f32 0.5, %v346
  %v348 = vsub.f32 1.5, %v347
  %v349 = vmul.f32 %v344, %v348
  %vm350 = vweird.f32 %v343
  %vm351 = vweird.f32 %v344
  %vm352 = vmor %vm350, %vm351
  %v353 = vsel %vm352, %v344, %v349
  %v354 = vmul.f32 %v296, %v353
  %v355 = vmul.f32 %v297, %v353
  %v356 = vmul.f32 %v298, %v353
  %v357 = vmul.f32 %v299, %v353
  %v359 = vperm.slane %v248, 0
  %v361 = vmul.f32 %v354, %v359
  %v362 = vmul.f32 %v355, %v359
  %v363 = vmul.f32 %v356, %v359
  %v364 = vmul.f32 %v357, %v359
  %v366 = vperm.slane %v249, 0
  %v368 = vadd.f32 %v361, %v366
  %v369 = vadd.f32 %v362, %v366
  %v370 = vadd.f32 %v363, %v366
  %v371 = vadd.f32 %v364, %v366
  %v372 = vmax.f32 %v368, 0.0
  %v373 = vmax.f32 %v369, 0.0
  %v374 = vmax.f32 %v370, 0.0
  %v375 = vmax.f32 %v371, 0.0
  %376 = vst [vmem:[#allocation2] sm:$0xff] 0.0
  %377 = vst [vmem:[#allocation2 + $0x8] sm:$0xff] 0.0
  %378 = vst [vmem:[#allocation2 + $0x10] sm:$0x3] 0.0
  %379 = vst [vmem:[#allocation2 + $0x18] sm:$0xff] 0.0
  %380 = vst [vmem:[#allocation2 + $0x20] sm:$0xff] 0.0
  %381 = vst [vmem:[#allocation2 + $0x28] sm:$0x3] 0.0
  %382 = vst [vmem:[#allocation2 + $0x1] sm:$0xff] %v372
  %383 = vst [vmem:[#allocation2 + $0x9] sm:$0xff] %v373
  %384 = vst [vmem:[#allocation2 + $0x19] sm:$0xff] %v374
  %385 = vst [vmem:[#allocation2 + $0x21] sm:$0xff] %v375
  %v386 = vld [vmem:[#allocation2] sm:$0xff]
  %v387 = vld [vmem:[#allocation2 + $0x8] sm:$0xff]
  %v388 = vld [vmem:[#allocation2 + $0x18] sm:$0xff]
  %v389 = vld [vmem:[#allocation2 + $0x20] sm:$0xff]
  %v390 = vpack.c.bf16 %v387, %v386
  %v391 = vpack.c.bf16 %v389, %v388
  %v392 = vld [vmem:[%s2] sm:$0xf]
  %v393 = vld [vmem:[%s2 + $0x4] sm:$0xf]
  %v394 = vld [vmem:[%s2 + $0x8] sm:$0xf]
  %v395 = vld [vmem:[%s2 + $0xc] sm:$0xf]
  %v396 = vld [vmem:[%s2 + $0x10] sm:$0xf]
  %v397 = vld [vmem:[%s2 + $0x14] sm:$0xf]
  %v398 = vld [vmem:[%s2 + $0x18] sm:$0xf]
  %v399 = vld [vmem:[%s2 + $0x1c] sm:$0xf]
  %v400 = vld [vmem:[%s2 + $0x20] sm:$0xf]
  %v401 = vld [vmem:[%s2 + $0x24] sm:$0xf]
  %v402 = vld [vmem:[%s2 + $0x28] sm:$0xf]
  %v403 = vld [vmem:[%s2 + $0x2c] sm:$0xf]
  %v404 = vld [vmem:[%s2 + $0x30] sm:$0xf]
  %v405 = vld [vmem:[%s2 + $0x34] sm:$0xf]
  %v406 = vld [vmem:[%s2 + $0x38] sm:$0xf]
  %v407 = vld [vmem:[%s2 + $0x3c] sm:$0xf]
  %v408 = vld [vmem:[#allocation2 + $0x1] sm:$0xff]
  %v409 = vld [vmem:[#allocation2 + $0x9] sm:$0xff]
  %v410 = vld [vmem:[#allocation2 + $0x19] sm:$0xff]
  %v411 = vld [vmem:[#allocation2 + $0x21] sm:$0xff]
  %v412 = vpack.c.bf16 %v409, %v408
  %v413 = vpack.c.bf16 %v411, %v410
  %s414 = scalar_lea.vmem %s2, 64
  %v415 = vld [vmem:[%s414] sm:$0xf]
  %v416 = vld [vmem:[%s414 + $0x4] sm:$0xf]
  %v417 = vld [vmem:[%s414 + $0x8] sm:$0xf]
  %v418 = vld [vmem:[%s414 + $0xc] sm:$0xf]
  %v419 = vld [vmem:[%s414 + $0x10] sm:$0xf]
  %v420 = vld [vmem:[%s414 + $0x14] sm:$0xf]
  %v421 = vld [vmem:[%s414 + $0x18] sm:$0xf]
  %v422 = vld [vmem:[%s414 + $0x1c] sm:$0xf]
  %v423 = vld [vmem:[%s414 + $0x20] sm:$0xf]
  %v424 = vld [vmem:[%s414 + $0x24] sm:$0xf]
  %v425 = vld [vmem:[%s414 + $0x28] sm:$0xf]
  %v426 = vld [vmem:[%s414 + $0x2c] sm:$0xf]
  %v427 = vld [vmem:[%s414 + $0x30] sm:$0xf]
  %v428 = vld [vmem:[%s414 + $0x34] sm:$0xf]
  %v429 = vld [vmem:[%s414 + $0x38] sm:$0xf]
  %v430 = vld [vmem:[%s414 + $0x3c] sm:$0xf]
  %v447 = vunpack.c.l.b16 %v415
  %v448 = vunpack.c.l.b16 %v416
  %v449 = vunpack.c.l.b16 %v417
  %v450 = vunpack.c.l.b16 %v418
  %v451 = vunpack.c.l.b16 %v419
  %v452 = vunpack.c.l.b16 %v420
  %v453 = vunpack.c.l.b16 %v421
  %v454 = vunpack.c.l.b16 %v422
  %v455 = vunpack.c.l.b16 %v423
  %v456 = vunpack.c.l.b16 %v424
  %v457 = vunpack.c.l.b16 %v425
  %v458 = vunpack.c.l.b16 %v426
  %v459 = vunpack.c.l.b16 %v427
  %v460 = vunpack.c.l.b16 %v428
  %v461 = vunpack.c.l.b16 %v429
  %v462 = vunpack.c.l.b16 %v430
  %v463 = vpack.c.b16 %v448, %v447
  %v464 = vpack.c.b16 %v450, %v449
  %v465 = vpack.c.b16 %v452, %v451
  %v466 = vpack.c.b16 %v454, %v453
  %v467 = vpack.c.b16 %v456, %v455
  %v468 = vpack.c.b16 %v458, %v457
  %v469 = vpack.c.b16 %v460, %v459
  %v470 = vpack.c.b16 %v462, %v461
  %479 = vmatpush.bf16.msra.mxu0 %v470
  %480 = vmatpush.bf16.msra.mxu0 %v469
  %481 = vmatpush.bf16.msra.mxu0 %v468
  %482 = vmatpush.bf16.msra.mxu0 %v467
  %483 = vmatpush.bf16.msra.mxu0 %v466
  %484 = vmatpush.bf16.msra.mxu0 %v465
  %485 = vmatpush.bf16.msra.mxu0 %v464
  %486 = vmatpush.bf16.msra.mxu0 %v463
  %487 = vmatmul.bf16.gmra.mxu0 %v412
  %v488 = vpop.f32.mrf.mxu0
  %v489 = vadd.f32 0.0, %v488
  %v490 = vpop.f32.mrf.mxu0
  %v491 = vadd.f32 0.0, %v490
  %492 = vmatmul.bf16.gmra.mxu0 %v413
  %v493 = vpop.f32.mrf.mxu0
  %v494 = vadd.f32 0.0, %v493
  %v495 = vpop.f32.mrf.mxu0
  %v496 = vadd.f32 0.0, %v495
  %497 = vdwg.mxu0
  %v514 = vunpack.c.l.b16 %v392
  %v515 = vunpack.c.l.b16 %v393
  %v516 = vunpack.c.l.b16 %v394
  %v517 = vunpack.c.l.b16 %v395
  %v518 = vunpack.c.l.b16 %v396
  %v519 = vunpack.c.l.b16 %v397
  %v520 = vunpack.c.l.b16 %v398
  %v521 = vunpack.c.l.b16 %v399
  %v522 = vunpack.c.l.b16 %v400
  %v523 = vunpack.c.l.b16 %v401
  %v524 = vunpack.c.l.b16 %v402
  %v525 = vunpack.c.l.b16 %v403
  %v526 = vunpack.c.l.b16 %v404
  %v527 = vunpack.c.l.b16 %v405
  %v528 = vunpack.c.l.b16 %v406
  %v529 = vunpack.c.l.b16 %v407
  %v530 = vpack.c.b16 %v515, %v514
  %v531 = vpack.c.b16 %v517, %v516
  %v532 = vpack.c.b16 %v519, %v518
  %v533 = vpack.c.b16 %v521, %v520
  %v534 = vpack.c.b16 %v523, %v522
  %v535 = vpack.c.b16 %v525, %v524
  %v536 = vpack.c.b16 %v527, %v526
  %v537 = vpack.c.b16 %v529, %v528
  %546 = vmatpush.bf16.msra.mxu0 %v537
  %547 = vmatpush.bf16.msra.mxu0 %v536
  %548 = vmatpush.bf16.msra.mxu0 %v535
  %549 = vmatpush.bf16.msra.mxu0 %v534
  %550 = vmatpush.bf16.msra.mxu0 %v533
  %551 = vmatpush.bf16.msra.mxu0 %v532
  %552 = vmatpush.bf16.msra.mxu0 %v531
  %553 = vmatpush.bf16.msra.mxu0 %v530
  %554 = vmatmul.bf16.gmra.mxu0 %v390
  %v555 = vpop.f32.mrf.mxu0
  %v556 = vadd.f32 %v489, %v555
  %v557 = vpop.f32.mrf.mxu0
  %v558 = vadd.f32 %v491, %v557
  %559 = vmatmul.bf16.gmra.mxu0 %v391
  %v560 = vpop.f32.mrf.mxu0
  %v561 = vadd.f32 %v494, %v560
  %v562 = vpop.f32.mrf.mxu0
  %v563 = vadd.f32 %v496, %v562
  %564 = vdwg.mxu0
  %v565 = vld [vmem:[#allocation2 + $0x2] sm:$0xff]
  %v566 = vld [vmem:[#allocation2 + $0xa] sm:$0xff]
  %v567 = vld [vmem:[#allocation2 + $0x1a] sm:$0xff]
  %v568 = vld [vmem:[#allocation2 + $0x22] sm:$0xff]
  %v569 = vpack.c.bf16 %v566, %v565
  %v570 = vpack.c.bf16 %v568, %v567
  %s571 = scalar_lea.vmem %s2, 128
  %v572 = vld [vmem:[%s571] sm:$0xf]
  %v573 = vld [vmem:[%s571 + $0x4] sm:$0xf]
  %v574 = vld [vmem:[%s571 + $0x8] sm:$0xf]
  %v575 = vld [vmem:[%s571 + $0xc] sm:$0xf]
  %v576 = vld [vmem:[%s571 + $0x10] sm:$0xf]
  %v577 = vld [vmem:[%s571 + $0x14] sm:$0xf]
  %v578 = vld [vmem:[%s571 + $0x18] sm:$0xf]
  %v579 = vld [vmem:[%s571 + $0x1c] sm:$0xf]
  %v580 = vld [vmem:[%s571 + $0x20] sm:$0xf]
  %v581 = vld [vmem:[%s571 + $0x24] sm:$0xf]
  %v582 = vld [vmem:[%s571 + $0x28] sm:$0xf]
  %v583 = vld [vmem:[%s571 + $0x2c] sm:$0xf]
  %v584 = vld [vmem:[%s571 + $0x30] sm:$0xf]
  %v585 = vld [vmem:[%s571 + $0x34] sm:$0xf]
  %v586 = vld [vmem:[%s571 + $0x38] sm:$0xf]
  %v587 = vld [vmem:[%s571 + $0x3c] sm:$0xf]
  %v604 = vunpack.c.l.b16 %v572
  %v605 = vunpack.c.l.b16 %v573
  %v606 = vunpack.c.l.b16 %v574
  %v607 = vunpack.c.l.b16 %v575
  %v608 = vunpack.c.l.b16 %v576
  %v609 = vunpack.c.l.b16 %v577
  %v610 = vunpack.c.l.b16 %v578
  %v611 = vunpack.c.l.b16 %v579
  %v612 = vunpack.c.l.b16 %v580
  %v613 = vunpack.c.l.b16 %v581
  %v614 = vunpack.c.l.b16 %v582
  %v615 = vunpack.c.l.b16 %v583
  %v616 = vunpack.c.l.b16 %v584
  %v617 = vunpack.c.l.b16 %v585
  %v618 = vunpack.c.l.b16 %v586
  %v619 = vunpack.c.l.b16 %v587
  %v620 = vpack.c.b16 %v605, %v604
  %v621 = vpack.c.b16 %v607, %v606
  %v622 = vpack.c.b16 %v609, %v608
  %v623 = vpack.c.b16 %v611, %v610
  %v624 = vpack.c.b16 %v613, %v612
  %v625 = vpack.c.b16 %v615, %v614
  %v626 = vpack.c.b16 %v617, %v616
  %v627 = vpack.c.b16 %v619, %v618
  %636 = vmatpush.bf16.msra.mxu0 %v627
  %637 = vmatpush.bf16.msra.mxu0 %v626
  %638 = vmatpush.bf16.msra.mxu0 %v625
  %639 = vmatpush.bf16.msra.mxu0 %v624
  %640 = vmatpush.bf16.msra.mxu0 %v623
  %641 = vmatpush.bf16.msra.mxu0 %v622
  %642 = vmatpush.bf16.msra.mxu0 %v621
  %643 = vmatpush.bf16.msra.mxu0 %v620
  %644 = vmatmul.bf16.gmra.mxu0 %v569
  %v645 = vpop.f32.mrf.mxu0
  %v646 = vadd.f32 0.0, %v645
  %v647 = vpop.f32.mrf.mxu0
  %v648 = vadd.f32 0.0, %v647
  %649 = vmatmul.bf16.gmra.mxu0 %v570
  %v650 = vpop.f32.mrf.mxu0
  %v651 = vadd.f32 0.0, %v650
  %v652 = vpop.f32.mrf.mxu0
  %v653 = vadd.f32 0.0, %v652
  %654 = vdwg.mxu0
  %v655 = vadd.f32 %v556, %v646
  %v656 = vadd.f32 %v558, %v648
  %v657 = vadd.f32 %v561, %v651
  %v658 = vadd.f32 %v563, %v653
  %v659 = vld [vmem:[%s6] sm:$0x1]
  %v660 = vld [vmem:[%s7] sm:$0x1]
  %661 = vmatpush.msra.mxu0 %v51
  %662 = vmatpush.msra.mxu0 %v50
  %663 = vmatpush.msra.mxu0 %v49
  %664 = vmatpush.msra.mxu0 %v48
  %665 = vmatpush.msra.mxu0 %v47
  %666 = vmatpush.msra.mxu0 %v46
  %667 = vmatpush.msra.mxu0 %v45
  %668 = vmatpush.msra.mxu0 %v44
  %669 = vmatpush.msra.mxu0 %v43
  %670 = vmatpush.msra.mxu0 %v42
  %671 = vmatpush.msra.mxu0 %v41
  %672 = vmatpush.msra.mxu0 %v40
  %673 = vmatpush.msra.mxu0 %v39
  %674 = vmatpush.msra.mxu0 %v38
  %675 = vmatpush.msra.mxu0 %v37
  %676 = vmatpush.msra.mxu0 %v36
  %677 = vmatmul.f32.gmra.mxu0 %v655
  %v678 = vpop.f32.mrf.mxu0
  %v679 = vadd.f32 0.0, %v678
  %680 = vmatmul.f32.gmra.mxu0 %v656
  %v681 = vpop.f32.mrf.mxu0
  %v682 = vadd.f32 0.0, %v681
  %683 = vmatmul.f32.gmra.mxu0 %v657
  %v684 = vpop.f32.mrf.mxu0
  %v685 = vadd.f32 0.0, %v684
  %686 = vmatmul.f32.gmra.mxu0 %v658
  %v687 = vpop.f32.mrf.mxu0
  %v688 = vadd.f32 0.0, %v687
  %689 = vdwg.mxu0
  %v690 = vadd.f32 %v679, %v682
  %v691 = vadd.f32 %v690, %v685
  %v692 = vadd.f32 %v691, %v688
  %v693 = vrot.slane %v692, 4
  %v694 = vadd.f32 %v692, %v693
  %v695 = vrot.slane %v694, 2
  %v696 = vadd.f32 %v694, %v695
  %v697 = vrot.slane %v696, 1
  %v698 = vadd.f32 %v696, %v697
  %v699 = vmul.f32 %v698, %v294
  %v700 = vsub.f32 %v655, %v699
  %v701 = vsub.f32 %v656, %v699
  %v702 = vsub.f32 %v657, %v699
  %v703 = vsub.f32 %v658, %v699
  %v704 = vmul.f32 %v700, %v700
  %v705 = vmul.f32 %v701, %v701
  %v706 = vmul.f32 %v702, %v702
  %v707 = vmul.f32 %v703, %v703
  %708 = vmatpush.msra.mxu0 %v51
  %709 = vmatpush.msra.mxu0 %v50
  %710 = vmatpush.msra.mxu0 %v49
  %711 = vmatpush.msra.mxu0 %v48
  %712 = vmatpush.msra.mxu0 %v47
  %713 = vmatpush.msra.mxu0 %v46
  %714 = vmatpush.msra.mxu0 %v45
  %715 = vmatpush.msra.mxu0 %v44
  %716 = vmatpush.msra.mxu0 %v43
  %717 = vmatpush.msra.mxu0 %v42
  %718 = vmatpush.msra.mxu0 %v41
  %719 = vmatpush.msra.mxu0 %v40
  %720 = vmatpush.msra.mxu0 %v39
  %721 = vmatpush.msra.mxu0 %v38
  %722 = vmatpush.msra.mxu0 %v37
  %723 = vmatpush.msra.mxu0 %v36
  %724 = vmatmul.f32.gmra.mxu0 %v704
  %v725 = vpop.f32.mrf.mxu0
  %v726 = vadd.f32 0.0, %v725
  %727 = vmatmul.f32.gmra.mxu0 %v705
  %v728 = vpop.f32.mrf.mxu0
  %v729 = vadd.f32 0.0, %v728
  %730 = vmatmul.f32.gmra.mxu0 %v706
  %v731 = vpop.f32.mrf.mxu0
  %v732 = vadd.f32 0.0, %v731
  %733 = vmatmul.f32.gmra.mxu0 %v707
  %v734 = vpop.f32.mrf.mxu0
  %v735 = vadd.f32 0.0, %v734
  %736 = vdwg.mxu0
  %v737 = vadd.f32 %v726, %v729
  %v738 = vadd.f32 %v737, %v732
  %v739 = vadd.f32 %v738, %v735
  %v740 = vrot.slane %v739, 4
  %v741 = vadd.f32 %v739, %v740
  %v742 = vrot.slane %v741, 2
  %v743 = vadd.f32 %v741, %v742
  %v744 = vrot.slane %v743, 1
  %v745 = vadd.f32 %v743, %v744
  %v746 = vmul.f32 %v745, %v294
  %v747 = vadd.f32 %v746, 1e-05
  %v748 = vrsqrt.pop %v747
  %v749 = vmul.f32 %v748, %v747
  %v750 = vmul.f32 %v749, %v748
  %v751 = vmul.f32 0.5, %v750
  %v752 = vsub.f32 1.5, %v751
  %v753 = vmul.f32 %v748, %v752
  %vm754 = vweird.f32 %v747
  %vm755 = vweird.f32 %v748
  %vm756 = vmor %vm754, %vm755
  %v757 = vsel %vm756, %v748, %v753
  %v758 = vmul.f32 %v700, %v757
  %v759 = vmul.f32 %v701, %v757
  %v760 = vmul.f32 %v702, %v757
  %v761 = vmul.f32 %v703, %v757
  %v763 = vperm.slane %v659, 0
  %v765 = vmul.f32 %v758, %v763
  %v766 = vmul.f32 %v759, %v763
  %v767 = vmul.f32 %v760, %v763
  %v768 = vmul.f32 %v761, %v763
  %v770 = vperm.slane %v660, 0
  %v772 = vadd.f32 %v765, %v770
  %v773 = vadd.f32 %v766, %v770
  %v774 = vadd.f32 %v767, %v770
  %v775 = vadd.f32 %v768, %v770
  %v776 = vld [vmem:[%s0 + $0x1] sm:$0xff]
  %v777 = vld [vmem:[%s0 + $0x9] sm:$0xff]
  %v778 = vld [vmem:[%s0 + $0x19] sm:$0xff]
  %v779 = vld [vmem:[%s0 + $0x21] sm:$0xff]
  %v780 = vpack.c.bf16 %v777, %v776
  %v781 = vpack.c.bf16 %v779, %v778
  %v782 = vld [vmem:[%s3] sm:$0xf]
  %v783 = vld [vmem:[%s3 + $0x4] sm:$0xf]
  %v784 = vld [vmem:[%s3 + $0x8] sm:$0xf]
  %v785 = vld [vmem:[%s3 + $0xc] sm:$0xf]
  %v786 = vld [vmem:[%s3 + $0x10] sm:$0xf]
  %v787 = vld [vmem:[%s3 + $0x14] sm:$0xf]
  %v788 = vld [vmem:[%s3 + $0x18] sm:$0xf]
  %v789 = vld [vmem:[%s3 + $0x1c] sm:$0xf]
  %v790 = vld [vmem:[%s8] sm:$0x1]
  %v792 = vperm.slane %v790, 0
  %v802 = vunpack.c.l.b16 %v782
  %v803 = vunpack.c.l.b16 %v783
  %v804 = vunpack.c.l.b16 %v784
  %v805 = vunpack.c.l.b16 %v785
  %v806 = vunpack.c.l.b16 %v786
  %v807 = vunpack.c.l.b16 %v787
  %v808 = vunpack.c.l.b16 %v788
  %v809 = vunpack.c.l.b16 %v789
  %v810 = vpack.c.b16 %v803, %v802
  %v811 = vpack.c.b16 %v805, %v804
  %v812 = vpack.c.b16 %v807, %v806
  %v813 = vpack.c.b16 %v809, %v808
  %v819 = vsel %vm105, %v780, 0
  %v822 = vsel %vm105, %v781, 0
  %824 = vmatpush.bf16.msra.mxu0 0
  %825 = vmatpush.bf16.msra.mxu0 0
  %826 = vmatpush.bf16.msra.mxu0 0
  %827 = vmatpush.bf16.msra.mxu0 0
  %828 = vmatpush.bf16.msra.mxu0 %v813
  %829 = vmatpush.bf16.msra.mxu0 %v812
  %830 = vmatpush.bf16.msra.mxu0 %v811
  %831 = vmatpush.bf16.msra.mxu0 %v810
  %832 = vmatmul.bf16.gmra.mxu0 %v819
  %v833 = vpop.f32.mrf.mxu0
  %v834 = vadd.f32 %v792, %v833
  %v835 = vpop.f32.mrf.mxu0
  %v836 = vadd.f32 %v792, %v835
  %837 = vmatmul.bf16.gmra.mxu0 %v822
  %v838 = vpop.f32.mrf.mxu0
  %v839 = vadd.f32 %v792, %v838
  %v840 = vpop.f32.mrf.mxu0
  %v841 = vadd.f32 %v792, %v840
  %842 = vdwg.mxu0
  %v843 = vadd.f32 %v772, %v834
  %v844 = vadd.f32 %v773, %v836
  %v845 = vadd.f32 %v774, %v839
  %v846 = vadd.f32 %v775, %v841
  %v847 = vmax.f32 %v843, 0.0
  %v848 = vmax.f32 %v844, 0.0
  %v849 = vmax.f32 %v845, 0.0
  %v850 = vmax.f32 %v846, 0.0
  %851 = vst [vmem:[%s10] sm:$0xff] %v847
  %852 = vst [vmem:[%s10 + $0x8] sm:$0xff] %v848
  %853 = vst [vmem:[%s10 + $0x10] sm:$0xff] %v849
  %854 = vst [vmem:[%s10 + $0x18] sm:$0xff] %v850
  // Predicated region
  $region42: #{residual_forward.1} parent=0 // pred_check
    _
  $region43: #{residual_forward.1} parent=0 // pred_check_branch
    %856 = sbr.rel (0) target = $region45
  $region44: #{residual_forward.1} parent=0 // pred_region
    _
  $region45: #{residual_forward.1} parent=0 // pred_fallthru
    _
  // Predicated region
  $region46: #{residual_forward.1} parent=0 // pred_check
    _
  $region47: #{residual_forward.1} parent=0 // pred_check_branch
    %858 = sbr.rel (0) target = $region49
  $region48: #{residual_forward.1} parent=0 // pred_region
    _
  $region49: #{residual_forward.1} parent=0 // pred_fallthru
    _

</llo_original>
